<compile_context>
chip_gen: v6e
topology: v6e:2x2x1
jax: 0.10.0
libtpu: 0.0.40
codegen_flags: <defaults>
</compile_context>

<pallas_src>
import functools

import jax
import jax.numpy as jnp
from jax.experimental import pallas as pl
from jax.experimental.pallas import tpu as pltpu


def _round_up(x: int, m: int) -> int:
    return ((x + m - 1) // m) * m


@functools.lru_cache(maxsize=1)
def _vmem_limit_bytes() -> int:
    """Generation-aware scoped-VMEM limit: ~3/4 of physical, capped at 96 MiB."""
    try:
        cap = pltpu.get_tpu_info().vmem_capacity_bytes
    except Exception:  # pragma: no cover - conservative fallback, safe on all chips
        cap = 64 * 1024 * 1024
    return max(32 * 1024 * 1024, min((cap * 3) // 4, 96 * 1024 * 1024))


# ----------------------------------------------------------------------------- kernels


def _linear_kernel_single_k(x_ref, w_ref, b_ref, o_ref):
    """Whole reduction in one tile: no accumulator scratch, direct bias-add + store."""
    acc = jnp.dot(x_ref[...], w_ref[...], preferred_element_type=jnp.float32)
    o_ref[...] = (acc + b_ref[...].astype(jnp.float32)).astype(o_ref.dtype)


def _linear_kernel_multi_k(x_ref, w_ref, b_ref, o_ref, acc_ref):
    """One (tm, tn) output tile; reduction over the K grid axis, f32 accumulation."""
    k = pl.program_id(2)

    @pl.when(k == 0)
    def _():
        # Bias folded into the accumulator init: added exactly once, no epilogue add.
        acc_ref[...] = jnp.broadcast_to(
            b_ref[...].astype(jnp.float32), acc_ref.shape
        )

    acc_ref[...] += jnp.dot(
        x_ref[...], w_ref[...], preferred_element_type=jnp.float32
    )

    @pl.when(k == pl.num_programs(2) - 1)
    def _():
        o_ref[...] = acc_ref[...].astype(o_ref.dtype)


# ----------------------------------------------------------------------- setup + call


def _choose_wk_tiles(cin: int, cout: int) -> tuple[int, int]:
    """Pick (tn, tk): 128/256-aligned, large enough to approach the HBM roofline."""
    n_al = _round_up(cout, 128)
    k_al = _round_up(cin, 128)
    tn = min(256, n_al)
    tk = min(512, k_al)
    # v7x megacore: prefer >= 2 N blocks so both TensorCores get work when the
    # batch only fills a single M block (harmless on single-TC v5e/v6e).
    if tn >= n_al and n_al >= 256:
        tn = _round_up(n_al // 2, 128)
    return tn, tk


def prepare_linear(w_out_in, b, *, compute_dtype=None):
    """One-time setup: transpose to [in, out], pad to tile multiples, optional bf16 cast.

    w_out_in: [out_features, in_features] (PyTorch nn.Linear layout)
    b:        [out_features]
    """
    cout, cin = w_out_in.shape
    tn, tk = _choose_wk_tiles(cin, cout)
    kp = _round_up(cin, tk)
    np_ = _round_up(cout, tn)

    w_io = jnp.asarray(w_out_in).T                       # persistent [in, out] layout
    b = jnp.asarray(b)
    wp = jnp.pad(w_io, ((0, kp - cin), (0, np_ - cout)))
    bp = jnp.pad(b.reshape(1, -1), ((0, 0), (0, np_ - cout)))
    if compute_dtype is not None:
        wp = wp.astype(compute_dtype)                    # cast ONCE, not per call

    return dict(
        wp=wp, bp=bp, w_io=w_io, b=b,
        tn=tn, tk=tk, cin=cin, cout=cout, compute_dtype=compute_dtype,
    )


@functools.partial(jax.jit, static_argnames=("cout", "tn", "tk", "compute_dtype"))
def linear_pallas(x, wp, bp, *, cout, tn, tk, compute_dtype=None):
    """y = x @ W + b with W/b already padded to tile multiples at setup.

    x:  [B, Cin]          (activation, padded/cast per call — cheap, it's the small operand)
    wp: [Kp, Np]          (pre-padded [in, out] weight, optionally bf16)
    bp: [1, Np]           (pre-padded bias)
    """
    B, cin = x.shape
    kp, np_ = wp.shape
    out_dtype = x.dtype

    # bf16 packs 16 sublanes per vreg -> round M to 16; f32 -> 8.
    m_align = 16 if compute_dtype == jnp.bfloat16 else 8
    tm = min(256, _round_up(B, m_align))
    mp = _round_up(B, tm)

    xp = x.astype(compute_dtype) if compute_dtype is not None else x
    xp = jnp.pad(xp, ((0, mp - B), (0, kp - cin)))

    grid_m, grid_n, k_steps = mp // tm, np_ // tn, kp // tk
    cparams = dict(vmem_limit_bytes=_vmem_limit_bytes())

    if k_steps == 1:
        out = pl.pallas_call(
            _linear_kernel_single_k,
            out_shape=jax.ShapeDtypeStruct((mp, np_), out_dtype),
            grid=(grid_m, grid_n),
            in_specs=[
                pl.BlockSpec((tm, tk), lambda i, j: (i, 0)),
                pl.BlockSpec((tk, tn), lambda i, j: (0, j)),
                pl.BlockSpec((1, tn), lambda i, j: (0, j)),
            ],
            out_specs=pl.BlockSpec((tm, tn), lambda i, j: (i, j)),
            compiler_params=pltpu.CompilerParams(
                dimension_semantics=("parallel", "parallel"), **cparams
            ),
        )(xp, wp, bp)
    else:
        # NOTE: if profiling shows exposed DMA on the K loop, add
        # pipeline_mode=pl.Buffered(3) on the streamed weight BlockSpec below.
        out = pl.pallas_call(
            _linear_kernel_multi_k,
            out_shape=jax.ShapeDtypeStruct((mp, np_), out_dtype),
            grid=(grid_m, grid_n, k_steps),
            in_specs=[
                pl.BlockSpec((tm, tk), lambda i, j, k: (i, k)),
                pl.BlockSpec((tk, tn), lambda i, j, k: (k, j)),
                pl.BlockSpec((1, tn), lambda i, j, k: (0, j)),
            ],
            out_specs=pl.BlockSpec((tm, tn), lambda i, j, k: (i, j)),
            scratch_shapes=[pltpu.VMEM((tm, tn), jnp.float32)],
            compiler_params=pltpu.CompilerParams(
                dimension_semantics=("parallel", "parallel", "arbitrary"), **cparams
            ),
        )(xp, wp, bp)

    return out[:B, :cout]


def decoder_forward(x, params, *, force_pallas=False):
    """Decoder.forward: x = self.fc(x)."""
    B, _ = x.shape
    cin, cout = params["cin"], params["cout"]
    # At tiny sizes the pallas_call launch + pad/slice copies dwarf the ~B*Cin*Cout FLOPs;
    # dispatch to plain jnp so XLA can fuse it into the producer of x.
    if not force_pallas and max(B, cin, cout) < 256:
        return (x @ params["w_io"].astype(x.dtype) + params["b"]).astype(x.dtype)
    return linear_pallas(
        x, params["wp"], params["bp"],
        cout=cout, tn=params["tn"], tk=params["tk"],
        compute_dtype=params["compute_dtype"],
    )


def xavier_uniform(key, shape):
    # shape = (out_features, in_features), PyTorch convention.
    fan_out, fan_in = shape
    limit = (6.0 / (fan_in + fan_out)) ** 0.5
    return jax.random.uniform(key, shape, jnp.float32, -limit, limit)


if __name__ == "__main__":
    in_channal = 4
    out_channel = 16
    hidden_channel = 32
    batch = 8

    key = jax.random.PRNGKey(0)
    kx, kw, kw1, kw2, kx2, kw_big = jax.random.split(key, 6)

    # Deterministic parameter init (mirrors Decoder.restart()): xavier weights, zero bias.
    fc_w = xavier_uniform(kw, (out_channel, in_channal))        # used by forward()
    fc_b = jnp.zeros((out_channel,), jnp.float32)
    # fc1 / fc2 / relu are defined in the module but never used in forward(); kept for fidelity.
    fc1_w = xavier_uniform(kw1, (hidden_channel, in_channal))
    fc1_b = jnp.zeros((hidden_channel,), jnp.float32)
    fc2_w = xavier_uniform(kw2, (out_channel, hidden_channel))
    fc2_b = jnp.zeros((out_channel,), jnp.float32)

    # One-time setup: transpose / pad / (optionally cast) the weight — never per call.
    params = prepare_linear(fc_w, fc_b)

    x = jax.random.normal(kx, (batch, in_channal), jnp.float32)
    y_ref = x @ fc_w.T + fc_b

    # 1) Pallas path forced at the module's own shapes (exercises the single-K kernel).
    y_pallas = decoder_forward(x, params, force_pallas=True)
    jax.block_until_ready(y_pallas)
    assert y_pallas.shape == (batch, out_channel)
    assert jnp.allclose(y_pallas, y_ref, atol=1e-5, rtol=1e-5)

    # 2) Auto-dispatch path: tiny shapes -> plain jnp (fused by XLA), identical result.
    y_auto = decoder_forward(x, params)
    jax.block_until_ready(y_auto)
    assert jnp.allclose(y_auto, y_ref, atol=1e-5, rtol=1e-5)

    # 3) Multi-K accumulator kernel + bf16-operand path on a modestly larger linear
    #    (also exercises the >= 2 N-block split for v7x megacore).
    B2, CIN2, COUT2 = 16, 640, 256
    w_big = xavier_uniform(kw_big, (COUT2, CIN2))
    b_big = jnp.zeros((COUT2,), jnp.float32)
    params_big = prepare_linear(w_big, b_big, compute_dtype=jnp.bfloat16)
    x2 = jax.random.normal(kx2, (B2, CIN2), jnp.float32)
    y2 = decoder_forward(x2, params_big, force_pallas=True)
    jax.block_until_ready(y2)
    y2_ref = x2 @ w_big.T + b_big
    assert y2.shape == (B2, COUT2)
    assert jnp.allclose(y2, y2_ref, atol=3e-2, rtol=3e-2)

    # TODO(synk): fc1/relu/fc2 are declared in the module but unreachable from forward();
    # if that path ever becomes active, fuse fc1+relu+fc2 into one Pallas kernel.
    print("KERNEL_OK")
</pallas_src>

<mosaic_0001>
module attributes {stable_mosaic.version = 11 : i64} {
  func.func @_linear_kernel_single_k(%arg0: i32, %arg1: i32, %arg2: memref<8x128xf32, #tpu.memory_space<vmem>>, %arg3: memref<128x128xf32, #tpu.memory_space<vmem>>, %arg4: memref<1x128xf32, #tpu.memory_space<vmem>>, %arg5: memref<8x128xf32, #tpu.memory_space<vmem>>) attributes {dimension_semantics = [#tpu.dimension_semantics<parallel>, #tpu.dimension_semantics<parallel>], iteration_bounds = array<i64: 1, 1>, scalar_prefetch = 0 : i64, scratch_operands = 0 : i64, tpu.core_type = #tpu.core_type<tc>, window_params = [{transform_indices = @transform_0, window_bounds = array<i64: 8, 128>}, {transform_indices = @transform_1, window_bounds = array<i64: 128, 128>}, {transform_indices = @transform_2, window_bounds = array<i64: 1, 128>}, {transform_indices = @transform_3, window_bounds = array<i64: 8, 128>}]} {
    %c0 = arith.constant 0 : index
    %c0_0 = arith.constant 0 : index
    %0 = vector.load %arg2[%c0, %c0_0] : memref<8x128xf32, #tpu.memory_space<vmem>>, vector<8x128xf32>
    %c0_1 = arith.constant 0 : index
    %c0_2 = arith.constant 0 : index
    %1 = vector.load %arg3[%c0_1, %c0_2] : memref<128x128xf32, #tpu.memory_space<vmem>>, vector<128x128xf32>
    %cst = arith.constant dense<0.000000e+00> : vector<8x128xf32>
    %2 = tpu.matmul %0, %1, %cst {dimension_numbers = #tpu.dot_dimension_numbers<[1], [0], [0], [1], [0, 0, 1, 1], [], []>} : vector<8x128xf32>, vector<128x128xf32>, vector<8x128xf32> -> vector<8x128xf32>
    %c0_3 = arith.constant 0 : index
    %c0_4 = arith.constant 0 : index
    %3 = vector.load %arg4[%c0_3, %c0_4] : memref<1x128xf32, #tpu.memory_space<vmem>>, vector<1x128xf32>
    %4 = vector.broadcast %3 : vector<1x128xf32> to vector<8x128xf32>
    %5 = arith.addf %2, %4 : vector<8x128xf32>
    %c0_5 = arith.constant 0 : index
    %c0_6 = arith.constant 0 : index
    %6 = vector.load %arg5[%c0_5, %c0_6] : memref<8x128xf32, #tpu.memory_space<vmem>>, vector<8x128xf32>
    tpu.vector_store %arg5[%c0_5, %c0_6], %5 {strides = array<i32>} : memref<8x128xf32, #tpu.memory_space<vmem>>, vector<8x128xf32>,
    return
  }
  func.func @transform_0(%arg0: i32, %arg1: i32) -> (i32, i32) {
    %c0_i32 = arith.constant 0 : i32
    %c0_i32_0 = arith.constant 0 : i32
    return %arg0, %c0_i32 : i32, i32
  }
  func.func @transform_1(%arg0: i32, %arg1: i32) -> (i32, i32) {
    %c0_i32 = arith.constant 0 : i32
    %c0_i32_0 = arith.constant 0 : i32
    return %c0_i32, %arg1 : i32, i32
  }
  func.func @transform_2(%arg0: i32, %arg1: i32) -> (i32, i32) {
    %c0_i32 = arith.constant 0 : i32
    %c0_i32_0 = arith.constant 0 : i32
    return %c0_i32, %arg1 : i32, i32
  }
  func.func @transform_3(%arg0: i32, %arg1: i32) -> (i32, i32) {
    %c0_i32 = arith.constant 0 : i32
    return %arg0, %arg1 : i32, i32
  }
}

</mosaic_0001>

<llo_original>
// kernel: linear_pallas.1
$region0: #{linear_pallas.1}
  #allocation0 [shape = 'u32[]', space=smem, size = 0x4, offset = 0x4, fixed_abs, tag = 'smem constant byte address 0x4 - core index']
  #allocation1 [shape = 'u32[144,128]{1,0:T(1,128)}', space=vmem, size = 0x12000, scoped, tag = 'internal scratch']
  %s0 = inlined_call_operand.vmem [shape: f32[8,128], index: 0, kind: input, shape index: {}]
  %s1 = inlined_call_operand.hbm [shape: f32[128,128], index: 1, kind: input, shape index: {}]
  %s2 = inlined_call_operand.vmem [shape: f32[1,128], index: 2, kind: input, shape index: {}]
  %s3 = inlined_call_operand.hbm [shape: f32[8,128], index: 3, kind: output, shape index: {}]
  %s4 = sld [smem:[#allocation0]]
  $region26: #{linear_pallas.1} parent=0
    _
  %s6 = ssub.s32 1, %s4
  %s7 = scalar_select 0, %s6, %s4
  $region1: #{linear_pallas.1} parent=0
    #allocation2 [shape = 'u8[65536]{0}', space=vmem, size = 0x10000, scoped, tag = 'input window, operand 1, single buffered']
    #allocation3 [shape = 's32[1]{0}', space=sflag, size = 0x4, scoped, tag = 'scoped memory for linear_pallas.1']
    #allocation4 [shape = 's32[1]{0}', space=sflag, size = 0x4, scoped, tag = 'scoped memory for linear_pallas.1']
    #allocation5 [shape = 'u8[4096]{0}', space=vmem, size = 0x1000, scoped, tag = 'output window, operand 0, single buffered']
    %8 = vsyncpa [#allocation3], 0
    %9 = vsyncpa [#allocation4], 0
    // Predicated region
    $region2: #{linear_pallas.1} parent=1 // pred_check
      _
    $region3: #{linear_pallas.1} parent=1 // pred_check_branch
      %11 = sbr.rel (0) target = $region5
    $region4: #{linear_pallas.1} parent=1 // pred_region
      _
    $region5: #{linear_pallas.1} parent=1 // pred_fallthru
      _
    // Predicated region
    $region6: #{linear_pallas.1} parent=1 // pred_check
      _
    $region7: #{linear_pallas.1} parent=1 // pred_check_branch
      %13 = sbr.rel (0) target = $region9
    $region8: #{linear_pallas.1} parent=1 // pred_region
      %s15 = ssub.s32 2048, 2048
      %16 = vsyncadd [#allocation3], %s15
      %s17 = sshll.u32 [#allocation2], 4
      %s18 = int_to_ptr.vmem [resolvable:$true] %s17
      %23 = dma.hbm_to_vmem [thread:$0]  %s1, 2048, %s18, [#allocation3], 128, 128, 8
    $region9: #{linear_pallas.1} parent=1 // pred_fallthru
      _
    // Predicated region
    $region10: #{linear_pallas.1} parent=1 // pred_check
      _
    $region11: #{linear_pallas.1} parent=1 // pred_check_branch
      %25 = sbr.rel (0) target = $region13
    $region12: #{linear_pallas.1} parent=1 // pred_region
      _
    $region13: #{linear_pallas.1} parent=1 // pred_fallthru
      _
    // Predicated region
    $region14: #{linear_pallas.1} parent=1 // pred_check
      _
    $region15: #{linear_pallas.1} parent=1 // pred_check_branch
      %27 = sbr.rel (0) target = $region17
    $region16: #{linear_pallas.1} parent=1 // pred_region
      %28 = dma.done [#allocation3], 2048
    $region17: #{linear_pallas.1} parent=1 // pred_fallthru
      _
    %v29 = vld [vmem:[%s0] sm:$0xff]
    %v30 = vld [vmem:[#allocation2] sm:$0xff]
    %v31 = vld [vmem:[#allocation2 + $0x8] sm:$0xff]
    %v32 = vld [vmem:[#allocation2 + $0x10] sm:$0xff]
    %v33 = vld [vmem:[#allocation2 + $0x18] sm:$0xff]
    %v34 = vld [vmem:[#allocation2 + $0x20] sm:$0xff]
    %v35 = vld [vmem:[#allocation2 + $0x28] sm:$0xff]
    %v36 = vld [vmem:[#allocation2 + $0x30] sm:$0xff]
    %v37 = vld [vmem:[#allocation2 + $0x38] sm:$0xff]
    %v38 = vld [vmem:[#allocation2 + $0x40] sm:$0xff]
    %v39 = vld [vmem:[#allocation2 + $0x48] sm:$0xff]
    %v40 = vld [vmem:[#allocation2 + $0x50] sm:$0xff]
    %v41 = vld [vmem:[#allocation2 + $0x58] sm:$0xff]
    %v42 = vld [vmem:[#allocation2 + $0x60] sm:$0xff]
    %v43 = vld [vmem:[#allocation2 + $0x68] sm:$0xff]
    %v44 = vld [vmem:[#allocation2 + $0x70] sm:$0xff]
    %v45 = vld [vmem:[#allocation2 + $0x78] sm:$0xff]
    %v46 = vld [vmem:[%s2] sm:$0x1]
    %v48 = vlaneseq
    %v49 = vshrl.u32 %v48, 7
    %v50 = vsub.s32 0, %v49
    %v51 = vrot.slane %v46, %v50
    %53 = vmatprep.subr.mxu0 0.0
    %54 = vmatpush1.msra.mxu0 %v45
    %55 = vmatprep.subr.mxu0 0.0
    %56 = vmatpush1.msra.mxu0 %v44
    %57 = vmatprep.subr.mxu0 0.0
    %58 = vmatpush1.msra.mxu0 %v43
    %59 = vmatprep.subr.mxu0 0.0
    %60 = vmatpush1.msra.mxu0 %v42
    %61 = vmatprep.subr.mxu0 0.0
    %62 = vmatpush1.msra.mxu0 %v41
    %63 = vmatprep.subr.mxu0 0.0
    %64 = vmatpush1.msra.mxu0 %v40
    %65 = vmatprep.subr.mxu0 0.0
    %66 = vmatpush1.msra.mxu0 %v39
    %67 = vmatprep.subr.mxu0 0.0
    %68 = vmatpush1.msra.mxu0 %v38
    %69 = vmatprep.subr.mxu0 0.0
    %70 = vmatpush1.msra.mxu0 %v37
    %71 = vmatprep.subr.mxu0 0.0
    %72 = vmatpush1.msra.mxu0 %v36
    %73 = vmatprep.subr.mxu0 0.0
    %74 = vmatpush1.msra.mxu0 %v35
    %75 = vmatprep.subr.mxu0 0.0
    %76 = vmatpush1.msra.mxu0 %v34
    %77 = vmatprep.subr.mxu0 0.0
    %78 = vmatpush1.msra.mxu0 %v33
    %79 = vmatprep.subr.mxu0 0.0
    %80 = vmatpush1.msra.mxu0 %v32
    %81 = vmatprep.subr.mxu0 0.0
    %82 = vmatpush1.msra.mxu0 %v31
    %83 = vmatprep.subr.mxu0 0.0
    %84 = vmatpush1.msra.mxu0 %v30
    %85 = vmatprep.subr.mxu0 0.0
    %86 = vmatpush2.msra.mxu0 0.0
    %87 = vmatprep.subr.mxu0 0.0
    %88 = vmatpush2.msra.mxu0 0.0
    %89 = vmatprep.subr.mxu0 0.0
    %90 = vmatpush2.msra.mxu0 0.0
    %91 = vmatprep.subr.mxu0 0.0
    %92 = vmatpush2.msra.mxu0 0.0
    %93 = vmatprep.subr.mxu0 0.0
    %94 = vmatpush2.msra.mxu0 0.0
    %95 = vmatprep.subr.mxu0 0.0
    %96 = vmatpush2.msra.mxu0 0.0
    %97 = vmatprep.subr.mxu0 0.0
    %98 = vmatpush2.msra.mxu0 0.0
    %99 = vmatprep.subr.mxu0 0.0
    %100 = vmatpush2.msra.mxu0 0.0
    %101 = vmatprep.subr.mxu0 0.0
    %102 = vmatpush2.msra.mxu0 0.0
    %103 = vmatprep.subr.mxu0 0.0
    %104 = vmatpush2.msra.mxu0 0.0
    %105 = vmatprep.subr.mxu0 0.0
    %106 = vmatpush2.msra.mxu0 0.0
    %107 = vmatprep.subr.mxu0 0.0
    %108 = vmatpush2.msra.mxu0 0.0
    %109 = vmatprep.subr.mxu0 0.0
    %110 = vmatpush2.msra.mxu0 0.0
    %111 = vmatprep.subr.mxu0 0.0
    %112 = vmatpush2.msra.mxu0 0.0
    %113 = vmatprep.subr.mxu0 0.0
    %114 = vmatpush2.msra.mxu0 0.0
    %115 = vmatprep.subr.mxu0 0.0
    %116 = vmatpush2.msra.mxu0 0.0
    %117 = vmatprep.mubr.f32.mxu0 0.0
    %118 = vmatmul.mubr.f32.gmra.mxu0 %v29
    %v119 = vpop.f32.mrf.mxu0
    %v120 = vadd.f32 %v51, %v119
    %v121 = vpop.f32.mrf.mxu0
    %122 = vdwg.mxu0
    %123 = vst [vmem:[#allocation5] sm:$0xff] %v120
    // Predicated region
    $region18: #{linear_pallas.1} parent=1 // pred_check
      _
    $region19: #{linear_pallas.1} parent=1 // pred_check_branch
      %125 = sbr.rel (0) target = $region21
    $region20: #{linear_pallas.1} parent=1 // pred_region
      %s127 = ssub.s32 128, 128
      %128 = vsyncadd [#allocation4], %s127
      %s130 = sshll.u32 [#allocation5], 4
      %s131 = int_to_ptr.vmem [resolvable:$true] %s130
      %133 = dma.vmem_to_hbm [thread:$0]  %s131, 128, %s3, [#allocation4]
    $region21: #{linear_pallas.1} parent=1 // pred_fallthru
      _
    // Predicated region
    $region22: #{linear_pallas.1} parent=1 // pred_check
      _
    $region23: #{linear_pallas.1} parent=1 // pred_check_branch
      %135 = sbr.rel (0) target = $region25
    $region24: #{linear_pallas.1} parent=1 // pred_region
      %136 = dma.done [#allocation4], 128
    $region25: #{linear_pallas.1} parent=1 // pred_fallthru
      _
    %137 = vsyncpa [#allocation3], 1
    %138 = vsyncpa [#allocation4], 1

</llo_original>
